<compile_context>
chip_gen: v7x
topology: tpu7x:2x2x1
jax: 0.10.0
libtpu: 0.0.40
codegen_flags: <defaults>
</compile_context>

<pallas_src>
import jax
import jax.numpy as jnp
from jax import lax
from jax.experimental import pallas as pl
from jax.experimental.pallas import tpu as pltpu


# -----------------------------------------------------------------------------
# Kernel 1: fused Linear -> ReLU -> Linear projection over a row tile.
#   x_ref : (tm, d_in)  f32      w1_ref: (d_in, H)   bf16    b1_ref: (1, H)     f32
#   w2_ref: (H, d_out)  bf16     b2_ref: (1, d_out)  f32     o_ref : (tm, d_out) f32
# MXU fed in bf16; accumulation, bias and ReLU in f32 (safe on v5e's VPU).
# -----------------------------------------------------------------------------
def _mlp_kernel(x_ref, w1_ref, b1_ref, w2_ref, b2_ref, o_ref):
    x = x_ref[...].astype(jnp.bfloat16)
    h = jnp.dot(x, w1_ref[...], preferred_element_type=jnp.float32) + b1_ref[...]
    h = jnp.maximum(h, 0.0)
    o_ref[...] = (jnp.dot(h.astype(jnp.bfloat16), w2_ref[...],
                          preferred_element_type=jnp.float32)
                  + b2_ref[...]).astype(o_ref.dtype)


def mlp_project(x2d, w1_bf16, b1, w2_bf16, b2, *, row_tile=512):
    """(N, d_in) -> Linear(d_in,H) -> ReLU -> Linear(H,d_out), row-tiled & pipelined."""
    n, d_in = x2d.shape
    hidden = w1_bf16.shape[1]
    d_out = w2_bf16.shape[1]
    tm = n if n <= row_tile else row_tile     # multiple of 8 when tiled, full N when small
    return pl.pallas_call(
        _mlp_kernel,
        out_shape=jax.ShapeDtypeStruct((n, d_out), jnp.float32),
        grid=(pl.cdiv(n, tm),),
        in_specs=[
            pl.BlockSpec((tm, d_in), lambda i: (i, 0)),
            pl.BlockSpec((d_in, hidden), lambda i: (0, 0)),     # weights stay resident
            pl.BlockSpec((1, hidden), lambda i: (0, 0)),
            pl.BlockSpec((hidden, d_out), lambda i: (0, 0)),
            pl.BlockSpec((1, d_out), lambda i: (0, 0)),
        ],
        out_specs=pl.BlockSpec((tm, d_out), lambda i: (i, 0)),
        compiler_params=pltpu.CompilerParams(dimension_semantics=("parallel",)),
    )(x2d, w1_bf16, b1.reshape(1, -1), w2_bf16, b2.reshape(1, -1))


def mlp_project_stacked(x3d, w1s, b1s, w2s, b2s, *, row_tile=512):
    """Same MLP with a leading {q,k,v} grid axis: one pallas_call for all three
    projections (used when tgt_len == src_len and d_q == d_k == d_v)."""
    g, n, d_in = x3d.shape
    hidden = w1s.shape[2]
    d_out = w2s.shape[2]
    tm = n if n <= row_tile else row_tile
    return pl.pallas_call(
        _mlp_kernel,
        out_shape=jax.ShapeDtypeStruct((g, n, d_out), jnp.float32),
        grid=(g, pl.cdiv(n, tm)),
        in_specs=[
            pl.BlockSpec((None, tm, d_in), lambda gi, i: (gi, i, 0)),
            pl.BlockSpec((None, d_in, hidden), lambda gi, i: (gi, 0, 0)),
            pl.BlockSpec((None, 1, hidden), lambda gi, i: (gi, 0, 0)),
            pl.BlockSpec((None, hidden, d_out), lambda gi, i: (gi, 0, 0)),
            pl.BlockSpec((None, 1, d_out), lambda gi, i: (gi, 0, 0)),
        ],
        out_specs=pl.BlockSpec((None, tm, d_out), lambda gi, i: (gi, i, 0)),
        compiler_params=pltpu.CompilerParams(
            dimension_semantics=("parallel", "parallel")),
    )(x3d, w1s, b1s, w2s, b2s)


# -----------------------------------------------------------------------------
# Kernel 2: attention for one (batch, head, kv-chunk) grid step, with the output
# projection accumulated over heads (grid axes: (bsz, nhead, kv-chunks)).
#   q_ref : (T, dq)       bf16     k_ref : (Skv, dk)   bf16    v_ref : (Skv, dv) bf16
#   ow_ref: (dv, dv)      bf16     ob_ref: (1, dv)     f32     o_ref : (T, dv)   f32
#   scratch: m_sc (T,1) f32, l_sc (T,1) f32, ctx_sc (T,dv) f32, out_sc (T,dv) f32
# -----------------------------------------------------------------------------
def _attn_kernel(q_ref, k_ref, v_ref, ow_ref, ob_ref, o_ref,
                 m_sc, l_sc, ctx_sc, out_sc):
    h = pl.program_id(1)
    kv = pl.program_id(2)
    last_h = pl.num_programs(1) - 1
    last_kv = pl.num_programs(2) - 1

    @pl.when(jnp.logical_and(h == 0, kv == 0))
    def _():                                   # out-projection accumulator (per batch)
        out_sc[...] = jnp.zeros(out_sc.shape, dtype=out_sc.dtype)

    @pl.when(kv == 0)
    def _():                                   # online-softmax state (per batch*head)
        m_sc[...] = jnp.full(m_sc.shape, -jnp.inf, dtype=m_sc.dtype)
        l_sc[...] = jnp.zeros(l_sc.shape, dtype=l_sc.dtype)
        ctx_sc[...] = jnp.zeros(ctx_sc.shape, dtype=ctx_sc.dtype)

    # q @ k^T without materializing a K transpose (contract the last axes).
    # q already carries the 1/sqrt(d_query) scaling (folded into its projection).
    s = lax.dot_general(q_ref[...], k_ref[...], (((1,), (1,)), ((), ())),
                        preferred_element_type=jnp.float32)          # (T, Skv) f32
    # TODO(synk): additive / boolean attn_mask would be applied to `s` here.

    m_new = jnp.maximum(m_sc[...], jnp.max(s, axis=-1, keepdims=True))
    alpha = jnp.exp(m_sc[...] - m_new)
    p = jnp.exp(s - m_new)
    l_sc[...] = alpha * l_sc[...] + jnp.sum(p, axis=-1, keepdims=True)
    ctx_sc[...] = alpha * ctx_sc[...] + jnp.dot(p.astype(v_ref.dtype), v_ref[...],
                                                preferred_element_type=jnp.float32)
    m_sc[...] = m_new

    @pl.when(kv == last_kv)
    def _():
        # Dropout(p=0.1) on attention weights: identity (eval-mode semantics).
        ctx = ctx_sc[...] * pl.reciprocal(l_sc[...], approx=True)     # (T, dv) f32
        out_sc[...] += jnp.dot(ctx.astype(ow_ref.dtype), ow_ref[...],
                               preferred_element_type=jnp.float32)

    @pl.when(jnp.logical_and(h == last_h, kv == last_kv))
    def _():
        o_ref[...] = (out_sc[...] + ob_ref[...]).astype(o_ref.dtype)


def attention_out(q_hm, k_hm, v_hm, out_w_bf16, out_b, *, nhead, d_value, kv_tile=512):
    """q_hm: (B, H, T, dq), k_hm/v_hm: (B, H, S, d) head-major bf16 -> (B, T, dv) f32."""
    bsz, _, tgt, dq = q_hm.shape
    src = k_hm.shape[2]
    dk = k_hm.shape[3]
    dv = v_hm.shape[3]

    tkv = src if src <= kv_tile else kv_tile
    if src % tkv:
        tkv = src   # TODO(synk): mask the ragged final KV chunk instead of full-S fallback.
    nkv = src // tkv

    ow3 = out_w_bf16.reshape(nhead, dv, dv)    # row block h of W_out, free reshape

    return pl.pallas_call(
        _attn_kernel,
        out_shape=jax.ShapeDtypeStruct((bsz, tgt, dv), jnp.float32),
        grid=(bsz, nhead, nkv),
        in_specs=[
            pl.BlockSpec((None, None, tgt, dq), lambda b, h, kv: (b, h, 0, 0)),
            pl.BlockSpec((None, None, tkv, dk), lambda b, h, kv: (b, h, kv, 0)),
            pl.BlockSpec((None, None, tkv, dv), lambda b, h, kv: (b, h, kv, 0)),
            pl.BlockSpec((None, dv, dv), lambda b, h, kv: (h, 0, 0)),
            pl.BlockSpec((1, dv), lambda b, h, kv: (0, 0)),
        ],
        # Output block index ignores (h, kv): buffer stays resident across the
        # reductions and is written back to HBM once per batch (dense minor dims).
        out_specs=pl.BlockSpec((None, tgt, dv), lambda b, h, kv: (b, 0, 0)),
        scratch_shapes=[
            pltpu.VMEM((tgt, 1), jnp.float32),    # m (running max)
            pltpu.VMEM((tgt, 1), jnp.float32),    # l (running denom)
            pltpu.VMEM((tgt, dv), jnp.float32),   # ctx (un-normalized context)
            pltpu.VMEM((tgt, dv), jnp.float32),   # out-projection accumulator
        ],
        compiler_params=pltpu.CompilerParams(
            dimension_semantics=("parallel", "arbitrary", "arbitrary"),
            # Explicit scoped-VMEM budget valid on v7x (64 MiB physical); block
            # sizes are bounded by kv_tile/tgt so usage stays far below this.
            vmem_limit_bytes=32 * 1024 * 1024,
        ),
    )(q_hm, k_hm, v_hm, ow3, out_b.reshape(1, -1))


# -----------------------------------------------------------------------------
# Full module forward
# -----------------------------------------------------------------------------
def multihead_attention(params, query, key, value, *, nhead, d_query, d_key, d_value,
                        row_tile=512, kv_tile=512):
    tgt_len, bsz, _ = query.shape
    src_len = key.shape[0]
    assert d_query == d_key, "q @ k^T requires d_query == d_key (as in the torch module)"
    scaling = float(d_query) ** (-0.5)

    qw1, qb1, qw2, qb2 = params["q"]
    kw1, kb1, kw2, kb2 = params["k"]
    vw1, vb1, vw2, vb2 = params["v"]

    # Fold `query *= scaling` into the q-projection's second Linear (done once,
    # constant-folded by XLA) -- no per-step VPU scaling in the attention kernel.
    qw2 = qw2 * scaling
    qb2 = qb2 * scaling

    bf = lambda w: w.astype(jnp.bfloat16)      # MXU-side weights in bf16

    if tgt_len == src_len and d_query == d_key == d_value:
        # One projection pallas_call with a leading {q,k,v} grid axis.
        x3 = jnp.stack([query.reshape(-1, d_query),
                        key.reshape(-1, d_key),
                        value.reshape(-1, d_value)])
        w1s = jnp.stack([bf(qw1), bf(kw1), bf(vw1)])
        b1s = jnp.stack([qb1, kb1, vb1]).reshape(3, 1, -1)
        w2s = jnp.stack([bf(qw2), bf(kw2), bf(vw2)])
        b2s = jnp.stack([qb2, kb2, vb2]).reshape(3, 1, -1)
        proj = mlp_project_stacked(x3, w1s, b1s, w2s, b2s, row_tile=row_tile)
        q2d, k2d, v2d = proj[0], proj[1], proj[2]
    else:
        q2d = mlp_project(query.reshape(-1, d_query), bf(qw1), qb1, bf(qw2), qb2,
                          row_tile=row_tile)
        k2d = mlp_project(key.reshape(-1, d_key), bf(kw1), kb1, bf(kw2), kb2,
                          row_tile=row_tile)
        v2d = mlp_project(value.reshape(-1, d_value), bf(vw1), vb1, bf(vw2), vb2,
                          row_tile=row_tile)

    # Head-major (bsz, nhead, seq, d) layout: one fused XLA transpose + bf16
    # downcast per tensor.  Buys clean un-padded (seq, d) per-head VMEM blocks in
    # the attention kernel (vs (nhead=4, d=16) minor dims padding every head slab
    # to an (8,128) tile) and halves the attention kernel's HBM->VMEM DMA bytes.
    q_hm = q2d.reshape(tgt_len, bsz, nhead, d_query).transpose(1, 2, 0, 3).astype(jnp.bfloat16)
    k_hm = k2d.reshape(src_len, bsz, nhead, d_key).transpose(1, 2, 0, 3).astype(jnp.bfloat16)
    v_hm = v2d.reshape(src_len, bsz, nhead, d_value).transpose(1, 2, 0, 3).astype(jnp.bfloat16)

    out_bt = attention_out(q_hm, k_hm, v_hm,
                           params["out_w"].astype(jnp.bfloat16), params["out_b"],
                           nhead=nhead, d_value=d_value, kv_tile=kv_tile)
    return out_bt.transpose(1, 0, 2)           # (bsz, T, dv) -> (T, bsz, dv)


# -----------------------------------------------------------------------------
# Pure-JAX reference (mirrors the PyTorch module) for a correctness check.
# -----------------------------------------------------------------------------
def reference_forward(params, query, key, value, *, nhead, d_query, d_key, d_value):
    tgt_len, bsz, _ = query.shape
    src_len = key.shape[0]
    scaling = float(d_query) ** (-0.5)

    def mlp(x, w1, b1, w2, b2):
        return jnp.maximum(x @ w1 + b1, 0.0) @ w2 + b2

    q = mlp(query.reshape(-1, d_query), *params["q"]) * scaling
    k = mlp(key.reshape(-1, d_key), *params["k"])
    v = mlp(value.reshape(-1, d_value), *params["v"])
    q = q.reshape(tgt_len, bsz * nhead, d_query).transpose(1, 0, 2)
    k = k.reshape(src_len, bsz * nhead, d_key).transpose(1, 0, 2)
    v = v.reshape(src_len, bsz * nhead, d_value).transpose(1, 0, 2)
    w = jax.nn.softmax(jnp.einsum("btd,bsd->bts", q, k), axis=-1)
    ctx = jnp.einsum("bts,bsd->btd", w, v)
    ctx = ctx.transpose(1, 0, 2).reshape(tgt_len, bsz, nhead * d_value)
    return ctx @ params["out_w"] + params["out_b"]


# -----------------------------------------------------------------------------
# Deterministic parameter construction (synthetic weights)
# -----------------------------------------------------------------------------
def init_params(key, d_query, d_key, d_value, nhead, hidden=256, dtype=jnp.float32):
    ks = jax.random.split(key, 14)

    def lin(kw, kb, d_in, d_out):
        w = (jax.random.normal(kw, (d_in, d_out), dtype) * 0.05).astype(dtype)
        b = (jax.random.normal(kb, (d_out,), dtype) * 0.05).astype(dtype)
        return w, b

    qw1, qb1 = lin(ks[0], ks[1], d_query, hidden)
    qw2, qb2 = lin(ks[2], ks[3], hidden, nhead * d_query)
    kw1, kb1 = lin(ks[4], ks[5], d_key, hidden)
    kw2, kb2 = lin(ks[6], ks[7], hidden, nhead * d_key)
    vw1, vb1 = lin(ks[8], ks[9], d_value, hidden)
    vw2, vb2 = lin(ks[10], ks[11], hidden, nhead * d_value)
    ow, ob = lin(ks[12], ks[13], nhead * d_value, d_value)

    return {
        "q": (qw1, qb1, qw2, qb2),
        "k": (kw1, kb1, kw2, kb2),
        "v": (vw1, vb1, vw2, vb2),
        "out_w": ow,
        "out_b": ob,
    }


# -----------------------------------------------------------------------------
if __name__ == "__main__":
    d_query = 16
    d_key = 16       # must equal d_query for q @ k^T (as in the torch module)
    d_value = 16
    nhead = 4
    tgt_len, src_len, bsz = 8, 8, 2

    root = jax.random.PRNGKey(0)
    kp, kq, kk, kv = jax.random.split(root, 4)

    params = init_params(kp, d_query, d_key, d_value, nhead)

    query = jax.random.normal(kq, (tgt_len, bsz, d_query), jnp.float32)
    key_t = jax.random.normal(kk, (src_len, bsz, d_key), jnp.float32)
    value = jax.random.normal(kv, (src_len, bsz, d_value), jnp.float32)

    out = multihead_attention(
        params, query, key_t, value,
        nhead=nhead, d_query=d_query, d_key=d_key, d_value=d_value,
    )
    out = jax.block_until_ready(out)
    assert out.shape == (tgt_len, bsz, d_value)

    ref = reference_forward(
        params, query, key_t, value,
        nhead=nhead, d_query=d_query, d_key=d_key, d_value=d_value,
    )
    max_err = float(jnp.max(jnp.abs(out - ref)))
    # bf16 MXU feeds + approx reciprocal vs an all-f32 reference.
    assert jnp.allclose(out, ref, atol=2e-2, rtol=2e-2), max_err
    print("KERNEL_OK")
</pallas_src>

<mosaic_0001>
module attributes {stable_mosaic.version = 11 : i64} {
  func.func @_mlp_kernel(%arg0: i32, %arg1: i32, %arg2: memref<1x16x16xf32, #tpu.memory_space<vmem>>, %arg3: memref<1x16x256xbf16, #tpu.memory_space<vmem>>, %arg4: memref<1x1x256xf32, #tpu.memory_space<vmem>>, %arg5: memref<1x256x64xbf16, #tpu.memory_space<vmem>>, %arg6: memref<1x1x64xf32, #tpu.memory_space<vmem>>, %arg7: memref<1x16x64xf32, #tpu.memory_space<vmem>>) attributes {dimension_semantics = [#tpu.dimension_semantics<parallel>, #tpu.dimension_semantics<parallel>], iteration_bounds = array<i64: 3, 1>, scalar_prefetch = 0 : i64, scratch_operands = 0 : i64, tpu.core_type = #tpu.core_type<tc>, window_params = [{transform_indices = @transform_0, window_bounds = array<i64: 1, 16, 16>}, {transform_indices = @transform_1, window_bounds = array<i64: 1, 16, 256>}, {transform_indices = @transform_2, window_bounds = array<i64: 1, 1, 256>}, {transform_indices = @transform_3, window_bounds = array<i64: 1, 256, 64>}, {transform_indices = @transform_4, window_bounds = array<i64: 1, 1, 64>}, {transform_indices = @transform_5, window_bounds = array<i64: 1, 16, 64>}]} {
    %c0 = arith.constant 0 : index
    %c0_0 = arith.constant 0 : index
    %c0_1 = arith.constant 0 : index
    %0 = vector.load %arg2[%c0, %c0_0, %c0_1] : memref<1x16x16xf32, #tpu.memory_space<vmem>>, vector<1x16x16xf32>
    %1 = vector.shape_cast %0 : vector<1x16x16xf32> to vector<16x16xf32>
    %2 = arith.truncf %1 : vector<16x16xf32> to vector<16x16xbf16>
    %c0_2 = arith.constant 0 : index
    %c0_3 = arith.constant 0 : index
    %c0_4 = arith.constant 0 : index
    %3 = vector.load %arg3[%c0_2, %c0_3, %c0_4] : memref<1x16x256xbf16, #tpu.memory_space<vmem>>, vector<1x16x256xbf16>
    %4 = vector.shape_cast %3 : vector<1x16x256xbf16> to vector<16x256xbf16>
    %cst = arith.constant dense<0.000000e+00> : vector<16x256xf32>
    %5 = tpu.matmul %2, %4, %cst {dimension_numbers = #tpu.dot_dimension_numbers<[1], [0], [0], [1], [0, 0, 1, 1], [], []>} : vector<16x16xbf16>, vector<16x256xbf16>, vector<16x256xf32> -> vector<16x256xf32>
    %c0_5 = arith.constant 0 : index
    %c0_6 = arith.constant 0 : index
    %c0_7 = arith.constant 0 : index
    %6 = vector.load %arg4[%c0_5, %c0_6, %c0_7] : memref<1x1x256xf32, #tpu.memory_space<vmem>>, vector<1x1x256xf32>
    %7 = vector.shape_cast %6 : vector<1x1x256xf32> to vector<1x256xf32>
    %8 = vector.broadcast %7 : vector<1x256xf32> to vector<16x256xf32>
    %9 = arith.addf %5, %8 : vector<16x256xf32>
    %cst_8 = arith.constant 0.000000e+00 : f32
    %10 = vector.broadcast %cst_8 : f32 to vector<16x256xf32>
    %11 = arith.maximumf %9, %10 : vector<16x256xf32>
    %12 = arith.truncf %11 : vector<16x256xf32> to vector<16x256xbf16>
    %c0_9 = arith.constant 0 : index
    %c0_10 = arith.constant 0 : index
    %c0_11 = arith.constant 0 : index
    %13 = vector.load %arg5[%c0_9, %c0_10, %c0_11] : memref<1x256x64xbf16, #tpu.memory_space<vmem>>, vector<1x256x64xbf16>
    %14 = vector.shape_cast %13 : vector<1x256x64xbf16> to vector<256x64xbf16>
    %cst_12 = arith.constant dense<0.000000e+00> : vector<16x64xf32>
    %15 = tpu.matmul %12, %14, %cst_12 {dimension_numbers = #tpu.dot_dimension_numbers<[1], [0], [0], [1], [0, 0, 1, 1], [], []>} : vector<16x256xbf16>, vector<256x64xbf16>, vector<16x64xf32> -> vector<16x64xf32>
    %c0_13 = arith.constant 0 : index
    %c0_14 = arith.constant 0 : index
    %c0_15 = arith.constant 0 : index
    %16 = vector.load %arg6[%c0_13, %c0_14, %c0_15] : memref<1x1x64xf32, #tpu.memory_space<vmem>>, vector<1x1x64xf32>
    %17 = vector.shape_cast %16 : vector<1x1x64xf32> to vector<1x64xf32>
    %18 = vector.broadcast %17 : vector<1x64xf32> to vector<16x64xf32>
    %19 = arith.addf %15, %18 : vector<16x64xf32>
    %c0_16 = arith.constant 0 : index
    %c0_17 = arith.constant 0 : index
    %c0_18 = arith.constant 0 : index
    %20 = vector.load %arg7[%c0_16, %c0_17, %c0_18] : memref<1x16x64xf32, #tpu.memory_space<vmem>>, vector<1x16x64xf32>
    %21 = vector.shape_cast %20 : vector<1x16x64xf32> to vector<16x64xf32>
    %22 = vector.shape_cast %19 : vector<16x64xf32> to vector<1x16x64xf32>
    tpu.vector_store %arg7[%c0_16, %c0_17, %c0_18], %22 {strides = array<i32>} : memref<1x16x64xf32, #tpu.memory_space<vmem>>, vector<1x16x64xf32>,
    return
  }
  func.func @transform_0(%arg0: i32, %arg1: i32) -> (i32, i32, i32) {
    %c0_i32 = arith.constant 0 : i32
    %c0_i32_0 = arith.constant 0 : i32
    return %arg0, %arg1, %c0_i32 : i32, i32, i32
  }
  func.func @transform_1(%arg0: i32, %arg1: i32) -> (i32, i32, i32) {
    %c0_i32 = arith.constant 0 : i32
    %c0_i32_0 = arith.constant 0 : i32
    %c0_i32_1 = arith.constant 0 : i32
    return %arg0, %c0_i32, %c0_i32_0 : i32, i32, i32
  }
  func.func @transform_2(%arg0: i32, %arg1: i32) -> (i32, i32, i32) {
    %c0_i32 = arith.constant 0 : i32
    %c0_i32_0 = arith.constant 0 : i32
    %c0_i32_1 = arith.constant 0 : i32
    return %arg0, %c0_i32, %c0_i32_0 : i32, i32, i32
  }
  func.func @transform_3(%arg0: i32, %arg1: i32) -> (i32, i32, i32) {
    %c0_i32 = arith.constant 0 : i32
    %c0_i32_0 = arith.constant 0 : i32
    %c0_i32_1 = arith.constant 0 : i32
    return %arg0, %c0_i32, %c0_i32_0 : i32, i32, i32
  }
  func.func @transform_4(%arg0: i32, %arg1: i32) -> (i32, i32, i32) {
    %c0_i32 = arith.constant 0 : i32
    %c0_i32_0 = arith.constant 0 : i32
    %c0_i32_1 = arith.constant 0 : i32
    return %arg0, %c0_i32, %c0_i32_0 : i32, i32, i32
  }
  func.func @transform_5(%arg0: i32, %arg1: i32) -> (i32, i32, i32) {
    %c0_i32 = arith.constant 0 : i32
    %c0_i32_0 = arith.constant 0 : i32
    return %arg0, %arg1, %c0_i32 : i32, i32, i32
  }
}

</mosaic_0001>

<llo_original>
// kernel: tpu_custom_call.1
$region0: #{tpu_custom_call.1}
  #allocation0 [shape = 'u32[]', space=smem, size = 0x4, offset = 0x4, fixed_abs, tag = 'smem constant byte address 0x4 - core index']
  #allocation1 [shape = 'u32[144,128]{1,0:T(1,128)}', space=vmem, size = 0x12000, scoped, tag = 'internal scratch']
  %s0 = inlined_call_operand.vmem [shape: f32[3,16,16], index: 0, kind: input, shape index: {}]
  %s1 = inlined_call_operand.vmem [shape: bf16[3,16,256], index: 1, kind: input, shape index: {}]
  %s2 = inlined_call_operand.vmem [shape: f32[3,1,256], index: 2, kind: input, shape index: {}]
  %s3 = inlined_call_operand.vmem [shape: bf16[3,256,64], index: 3, kind: input, shape index: {}]
  %s4 = inlined_call_operand.vmem [shape: f32[3,1,64], index: 4, kind: input, shape index: {}]
  %s5 = inlined_call_operand.hbm [shape: f32[3,16,64], index: 5, kind: output, shape index: {}]
  %s6 = sld [smem:[#allocation0]]
  $region53: #{tpu_custom_call.1} parent=0
    _
  %s8 = ssub.s32 1, %s6
  %s9 = scalar_select 0, %s8, %s6
  $region1: #{tpu_custom_call.1} parent=0
    #allocation2 [shape = 'u8[16384]{0}', space=vmem, size = 0x4000, scoped, tag = 'output window, operand 0']
    #allocation3 [shape = 's32[2]{0}', space=sflag, size = 0x8, scoped, tag = 'scoped memory for tpu_custom_call.1']
    %10 = vsyncpa [#allocation3], 0
    %s11 = scalar_lea.sflag [#allocation3], 1
    %12 = vsyncpa %s11, 0
    loop: start=0, step=1, limit=5
    $region2: #{tpu_custom_call.1} parent=1 // loop_pre_header
      _
    $region3: #{tpu_custom_call.1} parent=1 // loop_header
      %s14 = sphi 0, %s18
      %p15 = scmp.ge.s32.totalorder %s14, 5
      %s21 = sphi 0, %s33
      %s22 = sphi 0, %s29
      %s23 = sphi 0, %s21
      %s24 = sphi 0, %s22
      %s25 = sphi 0, %s23
      %s26 = sphi 0, %s24
      %s38 = sphi 0, %s40
      %s41 = sphi 0, %s38
      %s42 = sphi 0, %s41
      %s58 = sphi 0, %s42
      %s64 = sphi 0, %s66
      %s67 = sphi 0, %s64
      %s68 = sphi 0, %s67
      %s84 = sphi 0, %s68
      %s90 = sphi 0, %s92
      %s93 = sphi 0, %s90
      %s94 = sphi 0, %s93
      %s110 = sphi 0, %s94
      %s116 = sphi 0, %s118
      %s119 = sphi 0, %s116
      %s120 = sphi 0, %s119
      %s136 = sphi 0, %s120
      %s142 = sphi 0, %s144
      %s145 = sphi 0, %s142
      %s146 = sphi 0, %s145
      %s162 = sphi 0, %s146
      %s170 = sphi 0, %s172
      %s173 = sphi 0, %s170
      %s174 = sphi 0, %s173
      %s190 = sphi 0, %s174
    $region4: #{tpu_custom_call.1} parent=1 // loop_header_branch
      %17 = sbr.rel (%p15) target = $region8
    $region5: #{tpu_custom_call.1} parent=1 // loop_body
      %s19 = ssub.s32 %s14, 1
      %s20 = ssub.s32 %s14, 2
      %s27 = sadd.s32 1, %s22
      %p28 = scmp.ge.s32.totalorder %s27, 1
      %s29 = scalar_select %p28, 0, %s27
      %s30 = sadd.s32 1, %s21
      %s31 = scalar_select %p28, %s30, %s21
      %p32 = scmp.ge.s32.totalorder %s31, 3
      %s33 = scalar_select %p32, 0, %s31
      %s34 = ssub.s32 %s21, %s33
      %s35 = ssub.s32 %s22, %s29
      %s36 = sor.u32 %s34, %s35
      %p37 = scmp.eq.s32.totalorder %s36, 0
      %s39 = sadd.s32 %s38, 1
      %s40 = scalar_select %p37, %s38, %s39
      %p43 = pneg %p37
      %p44 = scmp.eq.s32.totalorder %s14, 2
      %p45 = por %p43, %p44
      %p46 = scmp.ne.s32.totalorder %s38, %s41
      %p47 = scmp.eq.s32.totalorder %s14, 0
      %p48 = por %p46, %p47
      %p49 = scmp.ne.s32.totalorder %s38, %s41
      %p50 = scmp.eq.s32.totalorder %s19, 2
      %p51 = por %p49, %p50
      %p52 = scmp.ne.s32.totalorder %s41, %s42
      %p53 = scmp.eq.s32.totalorder %s19, 0
      %p54 = por %p52, %p53
      %p55 = scmp.ne.s32.totalorder %s41, %s42
      %p56 = scmp.eq.s32.totalorder %s20, 2
      %p57 = por %p55, %p56
      %p59 = scmp.ne.s32.totalorder %s42, %s58
      %p60 = scmp.eq.s32.totalorder %s20, 0
      %p61 = por %p59, %p60
      %s62 = ssub.s32 %s21, %s33
      %p63 = scmp.eq.s32.totalorder %s62, 0
      %s65 = sadd.s32 %s64, 1
      %s66 = scalar_select %p63, %s64, %s65
      %p69 = pneg %p63
      %p70 = scmp.eq.s32.totalorder %s14, 2
      %p71 = por %p69, %p70
      %p72 = scmp.ne.s32.totalorder %s64, %s67
      %p73 = scmp.eq.s32.totalorder %s14, 0
      %p74 = por %p72, %p73
      %p75 = scmp.ne.s32.totalorder %s64, %s67
      %p76 = scmp.eq.s32.totalorder %s19, 2
      %p77 = por %p75, %p76
      %p78 = scmp.ne.s32.totalorder %s67, %s68
      %p79 = scmp.eq.s32.totalorder %s19, 0
      %p80 = por %p78, %p79
      %p81 = scmp.ne.s32.totalorder %s67, %s68
      %p82 = scmp.eq.s32.totalorder %s20, 2
      %p83 = por %p81, %p82
      %p85 = scmp.ne.s32.totalorder %s68, %s84
      %p86 = scmp.eq.s32.totalorder %s20, 0
      %p87 = por %p85, %p86
      %s88 = ssub.s32 %s21, %s33
      %p89 = scmp.eq.s32.totalorder %s88, 0
      %s91 = sadd.s32 %s90, 1
      %s92 = scalar_select %p89, %s90, %s91
      %p95 = pneg %p89
      %p96 = scmp.eq.s32.totalorder %s14, 2
      %p97 = por %p95, %p96
      %p98 = scmp.ne.s32.totalorder %s90, %s93
      %p99 = scmp.eq.s32.totalorder %s14, 0
      %p100 = por %p98, %p99
      %p101 = scmp.ne.s32.totalorder %s90, %s93
      %p102 = scmp.eq.s32.totalorder %s19, 2
      %p103 = por %p101, %p102
      %p104 = scmp.ne.s32.totalorder %s93, %s94
      %p105 = scmp.eq.s32.totalorder %s19, 0
      %p106 = por %p104, %p105
      %p107 = scmp.ne.s32.totalorder %s93, %s94
      %p108 = scmp.eq.s32.totalorder %s20, 2
      %p109 = por %p107, %p108
      %p111 = scmp.ne.s32.totalorder %s94, %s110
      %p112 = scmp.eq.s32.totalorder %s20, 0
      %p113 = por %p111, %p112
      %s114 = ssub.s32 %s21, %s33
      %p115 = scmp.eq.s32.totalorder %s114, 0
      %s117 = sadd.s32 %s116, 1
      %s118 = scalar_select %p115, %s116, %s117
      %p121 = pneg %p115
      %p122 = scmp.eq.s32.totalorder %s14, 2
      %p123 = por %p121, %p122
      %p124 = scmp.ne.s32.totalorder %s116, %s119
      %p125 = scmp.eq.s32.totalorder %s14, 0
      %p126 = por %p124, %p125
      %p127 = scmp.ne.s32.totalorder %s116, %s119
      %p128 = scmp.eq.s32.totalorder %s19, 2
      %p129 = por %p127, %p128
      %p130 = scmp.ne.s32.totalorder %s119, %s120
      %p131 = scmp.eq.s32.totalorder %s19, 0
      %p132 = por %p130, %p131
      %p133 = scmp.ne.s32.totalorder %s119, %s120
      %p134 = scmp.eq.s32.totalorder %s20, 2
      %p135 = por %p133, %p134
      %p137 = scmp.ne.s32.totalorder %s120, %s136
      %p138 = scmp.eq.s32.totalorder %s20, 0
      %p139 = por %p137, %p138
      %s140 = ssub.s32 %s21, %s33
      %p141 = scmp.eq.s32.totalorder %s140, 0
      %s143 = sadd.s32 %s142, 1
      %s144 = scalar_select %p141, %s142, %s143
      %p147 = pneg %p141
      %p148 = scmp.eq.s32.totalorder %s14, 2
      %p149 = por %p147, %p148
      %p150 = scmp.ne.s32.totalorder %s142, %s145
      %p151 = scmp.eq.s32.totalorder %s14, 0
      %p152 = por %p150, %p151
      %p153 = scmp.ne.s32.totalorder %s142, %s145
      %p154 = scmp.eq.s32.totalorder %s19, 2
      %p155 = por %p153, %p154
      %p156 = scmp.ne.s32.totalorder %s145, %s146
      %p157 = scmp.eq.s32.totalorder %s19, 0
      %p158 = por %p156, %p157
      %p159 = scmp.ne.s32.totalorder %s145, %s146
      %p160 = scmp.eq.s32.totalorder %s20, 2
      %p161 = por %p159, %p160
      %p163 = scmp.ne.s32.totalorder %s146, %s162
      %p164 = scmp.eq.s32.totalorder %s20, 0
      %p165 = por %p163, %p164
      %s166 = ssub.s32 %s21, %s33
      %s167 = ssub.s32 %s22, %s29
      %s168 = sor.u32 %s166, %s167
      %p169 = scmp.eq.s32.totalorder %s168, 0
      %s171 = sadd.s32 %s170, 1
      %s172 = scalar_select %p169, %s170, %s171
      %p175 = pneg %p169
      %p176 = scmp.eq.s32.totalorder %s14, 2
      %p177 = por %p175, %p176
      %p178 = scmp.ne.s32.totalorder %s170, %s173
      %p179 = scmp.eq.s32.totalorder %s14, 0
      %p180 = por %p178, %p179
      %p181 = scmp.ne.s32.totalorder %s170, %s173
      %p182 = scmp.eq.s32.totalorder %s19, 2
      %p183 = por %p181, %p182
      %p184 = scmp.ne.s32.totalorder %s173, %s174
      %p185 = scmp.eq.s32.totalorder %s19, 0
      %p186 = por %p184, %p185
      %p187 = scmp.ne.s32.totalorder %s173, %s174
      %p188 = scmp.eq.s32.totalorder %s20, 2
      %p189 = por %p187, %p188
      %p191 = scmp.ne.s32.totalorder %s174, %s190
      %p192 = scmp.eq.s32.totalorder %s20, 0
      %p193 = por %p191, %p192
      %p194 = scmp.le.s32.totalorder 1, %s14
      %p195 = scmp.lt.s32.totalorder %s14, 4
      %p196 = pnand %p194, %p195
      %p197 = pneg %p196
      // Predicated region
      $region9: #{tpu_custom_call.1} parent=5 // pred_check
        _
      $region10: #{tpu_custom_call.1} parent=5 // pred_check_branch
        %199 = sbr.rel (%p196) target = $region12
      $region11: #{tpu_custom_call.1} parent=5 // pred_region
        %s200 = ssub.s32 %s14, 1
      $region12: #{tpu_custom_call.1} parent=5 // pred_fallthru
        _
      %p201 = scmp.lt.s32.totalorder %s14, 3
      // Predicated region
      $region13: #{tpu_custom_call.1} parent=5 // pred_check
        %p202 = pneg %p201
      $region14: #{tpu_custom_call.1} parent=5 // pred_check_branch
        %204 = sbr.rel (%p202) target = $region16
      $region15: #{tpu_custom_call.1} parent=5 // pred_region
        // Predicated region
        $region17: #{tpu_custom_call.1} parent=15 // pred_check
          %p205 = pneg %p48
        $region18: #{tpu_custom_call.1} parent=15 // pred_check_branch
          %207 = sbr.rel (%p205) target = $region20
        $region19: #{tpu_custom_call.1} parent=15 // pred_region
          %s208 = smul.u32 2, %s22
          %p209 = scmp.lt.s32.totalorder %s21, 2
          %s210 = scalar_select %p209, %s21, 2
          %p211 = scmp.lt.s32.totalorder %s208, 1
          %s212 = scalar_select %p211, %s208, 1
          %s213 = smul.addr %s210, 2
          %s214 = sadd.s32 %s212, %s213
          %s215 = smul.addr %s214, 8
          %s216 = scalar_lea.vmem %s0, %s215
          %s217 = smul.u32 2, %s22
        $region20: #{tpu_custom_call.1} parent=15 // pred_fallthru
          _
        // Predicated region
        $region21: #{tpu_custom_call.1} parent=15 // pred_check
          %p218 = pneg %p74
        $region22: #{tpu_custom_call.1} parent=15 // pred_check_branch
          %220 = sbr.rel (%p218) target = $region24
        $region23: #{tpu_custom_call.1} parent=15 // pred_region
          %p221 = scmp.lt.s32.totalorder %s21, 2
          %s222 = scalar_select %p221, %s21, 2
          %s223 = smul.addr %s222, 4
          %s224 = smul.addr %s223, 4
          %s225 = scalar_lea.vmem %s1, %s224
        $region24: #{tpu_custom_call.1} parent=15 // pred_fallthru
          _
        // Predicated region
        $region25: #{tpu_custom_call.1} parent=15 // pred_check
          %p226 = pneg %p100
        $region26: #{tpu_custom_call.1} parent=15 // pred_check_branch
          %228 = sbr.rel (%p226) target = $region28
        $region27: #{tpu_custom_call.1} parent=15 // pred_region
          %p229 = scmp.lt.s32.totalorder %s21, 2
          %s230 = scalar_select %p229, %s21, 2
          %s231 = smul.addr %s230, 2
          %s232 = scalar_lea.vmem %s2, %s231
        $region28: #{tpu_custom_call.1} parent=15 // pred_fallthru
          _
        // Predicated region
        $region29: #{tpu_custom_call.1} parent=15 // pred_check
          %p233 = pneg %p126
        $region30: #{tpu_custom_call.1} parent=15 // pred_check_branch
          %235 = sbr.rel (%p233) target = $region32
        $region31: #{tpu_custom_call.1} parent=15 // pred_region
          %p236 = scmp.lt.s32.totalorder %s21, 2
          %s237 = scalar_select %p236, %s21, 2
          %s238 = smul.addr %s237, 32
          %s239 = smul.addr %s238, 4
          %s240 = scalar_lea.vmem %s3, %s239
        $region32: #{tpu_custom_call.1} parent=15 // pred_fallthru
          _
        // Predicated region
        $region33: #{tpu_custom_call.1} parent=15 // pred_check
          %p241 = pneg %p152
        $region34: #{tpu_custom_call.1} parent=15 // pred_check_branch
          %243 = sbr.rel (%p241) target = $region36
        $region35: #{tpu_custom_call.1} parent=15 // pred_region
          %p244 = scmp.lt.s32.totalorder %s21, 2
          %s245 = scalar_select %p244, %s21, 2
          %s246 = scalar_lea.vmem %s4, %s245
        $region36: #{tpu_custom_call.1} parent=15 // pred_fallthru
          _
      $region16: #{tpu_custom_call.1} parent=5 // pred_fallthru
        _
      %p247 = scmp.le.s32.totalorder 1, %s14
      %p248 = scmp.lt.s32.totalorder %s14, 4
      %p249 = pnand %p247, %p248
      %p250 = pneg %p249
      // Predicated region
      $region37: #{tpu_custom_call.1} parent=5 // pred_check
        _
      $region38: #{tpu_custom_call.1} parent=5 // pred_check_branch
        %252 = sbr.rel (%p249) target = $region40
      $region39: #{tpu_custom_call.1} parent=5 // pred_region
        %s253 = ssub.s32 %s14, 1
        %s254 = smul.u32 2, %s24
        %p255 = scmp.lt.s32.totalorder %s23, 2
        %s256 = scalar_select %p255, %s23, 2
        %p257 = scmp.lt.s32.totalorder %s254, 1
        %s258 = scalar_select %p257, %s254, 1
        %s259 = smul.addr %s256, 2
        %s260 = sadd.s32 %s258, %s259
        %s261 = smul.addr %s260, 8
        %s262 = scalar_lea.vmem %s0, %s261
        %p263 = pneg %p54
        %p264 = pneg %p51
        %p265 = scmp.lt.s32.totalorder %s23, 2
        %s266 = scalar_select %p265, %s23, 2
        %s267 = smul.addr %s266, 4
        %s268 = smul.addr %s267, 4
        %s269 = scalar_lea.vmem %s1, %s268
        %p270 = pneg %p80
        %p271 = pneg %p77
        %p272 = scmp.lt.s32.totalorder %s23, 2
        %s273 = scalar_select %p272, %s23, 2
        %s274 = smul.addr %s273, 2
        %s275 = scalar_lea.vmem %s2, %s274
        %p276 = pneg %p106
        %p277 = pneg %p103
        %p278 = scmp.lt.s32.totalorder %s23, 2
        %s279 = scalar_select %p278, %s23, 2
        %s280 = smul.addr %s279, 32
        %s281 = smul.addr %s280, 4
        %s282 = scalar_lea.vmem %s3, %s281
        %p283 = pneg %p132
        %p284 = pneg %p129
        %p285 = scmp.lt.s32.totalorder %s23, 2
        %s286 = scalar_select %p285, %s23, 2
        %s287 = scalar_lea.vmem %s4, %s286
        %p288 = pneg %p158
        %p289 = pneg %p155
        %p290 = pneg %p186
        %p291 = pneg %p183
        %s292 = sand.u32 %s173, 1
        %s293 = scalar_lea.sflag [#allocation3], %s292
        %s294 = sand.u32 %s173, 1
        %s295 = smul.addr %s294, 16
        %s296 = scalar_lea.vmem [#allocation2], %s295
        %s297 = smul.u32 2, %s24
        %p298 = scmp.lt.s32.totalorder %s23, 2
        %s299 = scalar_select %p298, %s23, 2
        %p300 = scmp.lt.s32.totalorder %s297, 1
        %s301 = scalar_select %p300, %s297, 1
        %s302 = smul.addr %s299, 2
        %s303 = sadd.s32 %s301, %s302
        %s304 = smul.addr %s303, 8
        %s305 = scalar_lea.vmem %s0, %s304
        %s306 = smul.u32 2, %s24
        %p307 = scmp.lt.s32.totalorder %s23, 2
        %s308 = scalar_select %p307, %s23, 2
        %s309 = smul.addr %s308, 4
        %s310 = smul.addr %s309, 4
        %s311 = scalar_lea.vmem %s1, %s310
        %p312 = scmp.lt.s32.totalorder %s23, 2
        %s313 = scalar_select %p312, %s23, 2
        %s314 = smul.addr %s313, 2
        %s315 = scalar_lea.vmem %s2, %s314
        %p316 = scmp.lt.s32.totalorder %s23, 2
        %s317 = scalar_select %p316, %s23, 2
        %s318 = smul.addr %s317, 32
        %s319 = smul.addr %s318, 4
        %s320 = scalar_lea.vmem %s3, %s319
        %p321 = scmp.lt.s32.totalorder %s23, 2
        %s322 = scalar_select %p321, %s23, 2
        %s323 = scalar_lea.vmem %s4, %s322
        %s324 = smul.u32 2, %s24
        %v326 = vld [vmem:[%s305] sm:$0xff]
        %v327 = vld [vmem:[%s305 + $0x8] sm:$0xff]
        %v328 = vpack.c.bf16 %v327, %v326
        %v329 = vld [vmem:[%s311] sm:$0xff]
        %v330 = vld [vmem:[%s311 + $0x8] sm:$0xff]
        %v331 = vld [vmem:[%s315] sm:$0x3]
        %v333 = vlaneseq
        %v334 = vshrl.u32 %v333, 7
        %v335 = vsub.s32 0, %v334
        %v336 = vrot.slane %v331, %v335
        %v337 = vlaneseq
        %v338 = vshrl.u32 %v337, 7
        %v339 = vsub.s32 1, %v338
        %v340 = vrot.slane %v331, %v339
        %v345 = vunpack.c.l.b16 %v329
        %v346 = vunpack.c.h.b16 %v329
        %v347 = vunpack.c.l.b16 %v330
        %v348 = vunpack.c.h.b16 %v330
        %v349 = vpack.c.b16 %v347, %v345
        %v350 = vpack.c.b16 %v348, %v346
        %vm353 = vcmask 130048
        %v355 = vsel %vm353, %v328, 0
        %357 = vmatprep.subr.bf16.mxu0 %v350
        %358 = vmatpush1.bf16.msra.mxu0 %v349
        %359 = vmatprep.subr.bf16.mxu0 0
        %360 = vmatpush1.bf16.msra.mxu0 0
        %361 = vmatprep.subr.bf16.mxu0 0
        %362 = vmatpush1.bf16.msra.mxu0 0
        %363 = vmatprep.subr.bf16.mxu0 0
        %364 = vmatpush1.bf16.msra.mxu0 0
        %365 = vmatprep.subr.bf16.mxu0 0
        %366 = vmatpush1.bf16.msra.mxu0 0
        %367 = vmatprep.subr.bf16.mxu0 0
        %368 = vmatpush1.bf16.msra.mxu0 0
        %369 = vmatprep.subr.bf16.mxu0 0
        %370 = vmatpush1.bf16.msra.mxu0 0
        %371 = vmatprep.subr.bf16.mxu0 0
        %372 = vmatpush1.bf16.msra.mxu0 0
        %373 = vmatprep.subr.bf16.mxu0 0
        %374 = vmatpush1.bf16.msra.mxu0 0
        %375 = vmatprep.subr.bf16.mxu0 0
        %376 = vmatpush1.bf16.msra.mxu0 0
        %377 = vmatprep.subr.bf16.mxu0 0
        %378 = vmatpush1.bf16.msra.mxu0 0
        %379 = vmatprep.subr.bf16.mxu0 0
        %380 = vmatpush1.bf16.msra.mxu0 0
        %381 = vmatprep.subr.bf16.mxu0 0
        %382 = vmatpush1.bf16.msra.mxu0 0
        %383 = vmatprep.subr.bf16.mxu0 0
        %384 = vmatpush1.bf16.msra.mxu0 0
        %385 = vmatprep.subr.bf16.mxu0 0
        %386 = vmatpush1.bf16.msra.mxu0 0
        %387 = vmatprep.subr.bf16.mxu0 0
        %388 = vmatpush1.bf16.msra.mxu0 0
        %389 = vmatprep.mubr.bf16.mxu0 0
        %390 = vmatmul.mubr.bf16.gmra.mrb[0].mxu0 %v355
        %v391 = vpop.f32.mrb[0].mxu0
        %v392 = vadd.f32 %v336, %v391
        %v393 = vpop.f32.mrb[0].mxu0
        %v394 = vadd.f32 %v340, %v393
        %v395 = vpop.f32.mrb[0].mxu0
        %v396 = vadd.f32 %v336, %v395
        %v397 = vpop.f32.mrb[0].mxu0
        %v398 = vadd.f32 %v340, %v397
        %399 = vdwg.mxu0
        %v400 = vmax.f32 %v392, 0.0
        %v401 = vmax.f32 %v394, 0.0
        %v402 = vmax.f32 %v396, 0.0
        %v403 = vmax.f32 %v398, 0.0
        %v404 = vpack.c.bf16 %v402, %v400
        %v405 = vpack.c.bf16 %v403, %v401
        %v406 = vld [vmem:[%s320] sm:$0xf]
        %v407 = vld [vmem:[%s320 + $0x4] sm:$0xf]
        %v408 = vld [vmem:[%s320 + $0x8] sm:$0xf]
        %v409 = vld [vmem:[%s320 + $0xc] sm:$0xf]
        %v410 = vld [vmem:[%s320 + $0x10] sm:$0xf]
        %v411 = vld [vmem:[%s320 + $0x14] sm:$0xf]
        %v412 = vld [vmem:[%s320 + $0x18] sm:$0xf]
        %v413 = vld [vmem:[%s320 + $0x1c] sm:$0xf]
        %v414 = vld [vmem:[%s320 + $0x20] sm:$0xf]
        %v415 = vld [vmem:[%s320 + $0x24] sm:$0xf]
        %v416 = vld [vmem:[%s320 + $0x28] sm:$0xf]
        %v417 = vld [vmem:[%s320 + $0x2c] sm:$0xf]
        %v418 = vld [vmem:[%s320 + $0x30] sm:$0xf]
        %v419 = vld [vmem:[%s320 + $0x34] sm:$0xf]
        %v420 = vld [vmem:[%s320 + $0x38] sm:$0xf]
        %v421 = vld [vmem:[%s320 + $0x3c] sm:$0xf]
        %v422 = vld [vmem:[%s320 + $0x40] sm:$0xf]
        %v423 = vld [vmem:[%s320 + $0x44] sm:$0xf]
        %v424 = vld [vmem:[%s320 + $0x48] sm:$0xf]
        %v425 = vld [vmem:[%s320 + $0x4c] sm:$0xf]
        %v426 = vld [vmem:[%s320 + $0x50] sm:$0xf]
        %v427 = vld [vmem:[%s320 + $0x54] sm:$0xf]
        %v428 = vld [vmem:[%s320 + $0x58] sm:$0xf]
        %v429 = vld [vmem:[%s320 + $0x5c] sm:$0xf]
        %v430 = vld [vmem:[%s320 + $0x60] sm:$0xf]
        %v431 = vld [vmem:[%s320 + $0x64] sm:$0xf]
        %v432 = vld [vmem:[%s320 + $0x68] sm:$0xf]
        %v433 = vld [vmem:[%s320 + $0x6c] sm:$0xf]
        %v434 = vld [vmem:[%s320 + $0x70] sm:$0xf]
        %v435 = vld [vmem:[%s320 + $0x74] sm:$0xf]
        %v436 = vld [vmem:[%s320 + $0x78] sm:$0xf]
        %v437 = vld [vmem:[%s320 + $0x7c] sm:$0xf]
        %v438 = vld [vmem:[%s323] sm:$0x1]
        %v440 = vlaneseq
        %v441 = vshrl.u32 %v440, 7
        %v442 = vsub.s32 0, %v441
        %v443 = vrot.slane %v438, %v442
        %v477 = vunpack.c.l.b16 %v406
        %v478 = vunpack.c.l.b16 %v407
        %v479 = vunpack.c.l.b16 %v408
        %v480 = vunpack.c.l.b16 %v409
        %v481 = vunpack.c.l.b16 %v410
        %v482 = vunpack.c.l.b16 %v411
        %v483 = vunpack.c.l.b16 %v412
        %v484 = vunpack.c.l.b16 %v413
        %v485 = vunpack.c.l.b16 %v414
        %v486 = vunpack.c.l.b16 %v415
        %v487 = vunpack.c.l.b16 %v416
        %v488 = vunpack.c.l.b16 %v417
        %v489 = vunpack.c.l.b16 %v418
        %v490 = vunpack.c.l.b16 %v419
        %v491 = vunpack.c.l.b16 %v420
        %v492 = vunpack.c.l.b16 %v421
        %v493 = vunpack.c.l.b16 %v422
        %v494 = vunpack.c.l.b16 %v423
        %v495 = vunpack.c.l.b16 %v424
        %v496 = vunpack.c.l.b16 %v425
        %v497 = vunpack.c.l.b16 %v426
        %v498 = vunpack.c.l.b16 %v427
        %v499 = vunpack.c.l.b16 %v428
        %v500 = vunpack.c.l.b16 %v429
        %v501 = vunpack.c.l.b16 %v430
        %v502 = vunpack.c.l.b16 %v431
        %v503 = vunpack.c.l.b16 %v432
        %v504 = vunpack.c.l.b16 %v433
        %v505 = vunpack.c.l.b16 %v434
        %v506 = vunpack.c.l.b16 %v435
        %v507 = vunpack.c.l.b16 %v436
        %v508 = vunpack.c.l.b16 %v437
        %v509 = vpack.c.b16 %v478, %v477
        %v510 = vpack.c.b16 %v480, %v479
        %v511 = vpack.c.b16 %v482, %v481
        %v512 = vpack.c.b16 %v484, %v483
        %v513 = vpack.c.b16 %v486, %v485
        %v514 = vpack.c.b16 %v488, %v487
        %v515 = vpack.c.b16 %v490, %v489
        %v516 = vpack.c.b16 %v492, %v491
        %v517 = vpack.c.b16 %v494, %v493
        %v518 = vpack.c.b16 %v496, %v495
        %v519 = vpack.c.b16 %v498, %v497
        %v520 = vpack.c.b16 %v500, %v499
        %v521 = vpack.c.b16 %v502, %v501
        %v522 = vpack.c.b16 %v504, %v503
        %v523 = vpack.c.b16 %v506, %v505
        %v524 = vpack.c.b16 %v508, %v507
        %541 = vmatprep.subr.bf16.mxu0 0
        %542 = vmatpush1.bf16.msra.mxu0 %v509
        %543 = vmatprep.subr.bf16.mxu0 0
        %544 = vmatpush1.bf16.msra.mxu0 %v510
        %545 = vmatprep.subr.bf16.mxu0 0
        %546 = vmatpush1.bf16.msra.mxu0 %v511
        %547 = vmatprep.subr.bf16.mxu0 0
        %548 = vmatpush1.bf16.msra.mxu0 %v512
        %549 = vmatprep.subr.bf16.mxu0 0
        %550 = vmatpush1.bf16.msra.mxu0 %v513
        %551 = vmatprep.subr.bf16.mxu0 0
        %552 = vmatpush1.bf16.msra.mxu0 %v514
        %553 = vmatprep.subr.bf16.mxu0 0
        %554 = vmatpush1.bf16.msra.mxu0 %v515
        %555 = vmatprep.subr.bf16.mxu0 0
        %556 = vmatpush1.bf16.msra.mxu0 %v516
        %557 = vmatprep.subr.bf16.mxu0 0
        %558 = vmatpush1.bf16.msra.mxu0 %v517
        %559 = vmatprep.subr.bf16.mxu0 0
        %560 = vmatpush1.bf16.msra.mxu0 %v518
        %561 = vmatprep.subr.bf16.mxu0 0
        %562 = vmatpush1.bf16.msra.mxu0 %v519
        %563 = vmatprep.subr.bf16.mxu0 0
        %564 = vmatpush1.bf16.msra.mxu0 %v520
        %565 = vmatprep.subr.bf16.mxu0 0
        %566 = vmatpush1.bf16.msra.mxu0 %v521
        %567 = vmatprep.subr.bf16.mxu0 0
        %568 = vmatpush1.bf16.msra.mxu0 %v522
        %569 = vmatprep.subr.bf16.mxu0 0
        %570 = vmatpush1.bf16.msra.mxu0 %v523
        %571 = vmatprep.subr.bf16.mxu0 0
        %572 = vmatpush1.bf16.msra.mxu0 %v524
        %573 = vmatprep.mubr.bf16.mxu0 %v405
        %574 = vmatmul.mubr.bf16.gmra.mrb[0].mxu0 %v404
        %v575 = vpop.f32.mrb[0].mxu0
        %v576 = vadd.f32 %v443, %v575
        %v577 = vpop.f32.mrb[0].mxu0
        %v578 = vpop.f32.mrb[0].mxu0
        %v579 = vadd.f32 %v443, %v578
        %v580 = vpop.f32.mrb[0].mxu0
        %581 = vdwg.mxu0
        %vm582 = vcmask 523264
        %583 = vst.msk [vmem:[%s296] sm:$0xff] %vm582, %v576
        %584 = vst.msk [vmem:[%s296 + $0x8] sm:$0xff] %vm582, %v579
        %s585 = sand.u32 %s173, 1
        %s586 = scalar_lea.sflag [#allocation3], %s585
        %s587 = sand.u32 %s173, 1
        %s588 = smul.addr %s587, 16
        %s589 = scalar_lea.vmem [#allocation2], %s588
        // Predicated region
        $region41: #{tpu_custom_call.1} parent=39 // pred_check
          %p590 = pneg %p183
        $region42: #{tpu_custom_call.1} parent=39 // pred_check_branch
          %592 = sbr.rel (%p590) target = $region44
        $region43: #{tpu_custom_call.1} parent=39 // pred_region
          %s593 = smul.u32 2, %s24
          %s595 = ssub.s32 256, 256
          %596 = vsyncadd %s586, %s595
          %s597 = smul.addr %s23, 2
          %s598 = sadd.s32 %s593, %s597
          %s599 = smul.addr %s598, 128
          %s600 = scalar_lea.hbm %s5, %s599
          %s601 = sshll.u32 %s589, 4
          %s602 = int_to_ptr.vmem [resolvable:$true] %s601
          %607 = dma.vmem_to_hbm [thread:$0]  %s602, 256, %s600, %s586, 128, 128, 8
        $region44: #{tpu_custom_call.1} parent=39 // pred_fallthru
          _
      $region40: #{tpu_custom_call.1} parent=5 // pred_fallthru
        _
      %p608 = scmp.le.s32.totalorder 2, %s14
      // Predicated region
      $region45: #{tpu_custom_call.1} parent=5 // pred_check
        %p609 = pneg %p608
      $region46: #{tpu_custom_call.1} parent=5 // pred_check_branch
        %611 = sbr.rel (%p609) target = $region48
      $region47: #{tpu_custom_call.1} parent=5 // pred_region
        %s612 = ssub.s32 %s14, 2
        // Predicated region
        $region49: #{tpu_custom_call.1} parent=47 // pred_check
          %p613 = pneg %p189
        $region50: #{tpu_custom_call.1} parent=47 // pred_check_branch
          %615 = sbr.rel (%p613) target = $region52
        $region51: #{tpu_custom_call.1} parent=47 // pred_region
          %s616 = sand.u32 %s174, 1
          %s617 = scalar_lea.sflag [#allocation3], %s616
          %s618 = sand.u32 %s174, 1
          %s619 = smul.addr %s618, 16
          %s620 = scalar_lea.vmem [#allocation2], %s619
          %621 = dma.done %s617, 256
        $region52: #{tpu_custom_call.1} parent=47 // pred_fallthru
          _
      $region48: #{tpu_custom_call.1} parent=5 // pred_fallthru
        _
    $region6: #{tpu_custom_call.1} parent=1 // loop_footer
      %s18 = sadd.s32 1, %s14
    $region7: #{tpu_custom_call.1} parent=1 // loop_footer_branch
      %13 = sbr.rel target = $region3
    $region8: #{tpu_custom_call.1} parent=1 // loop_exit
      _
    %622 = vsyncpa [#allocation3], 1
    %s623 = scalar_lea.sflag [#allocation3], 1
    %624 = vsyncpa %s623, 1

</llo_original>
